<compile_context>
chip_gen: v5e
topology: v5e:2x2
jax: 0.10.0
libtpu: 0.0.40
codegen_flags: <defaults>
</compile_context>

<pallas_src>
import math

import jax
import jax.numpy as jnp
from jax.experimental import pallas as pl
from jax.experimental.pallas import tpu as pltpu


def _round_up(x, m):
    return ((x + m - 1) // m) * m


def _vmem_capacity_bytes():
    try:
        cap = int(getattr(pltpu.get_tpu_info(), "vmem_capacity_bytes"))
        if cap > 0:
            return cap
    except Exception:
        pass
    return 64 << 20  # conservative fallback: v7x per-TensorCore VMEM


def _gelu_erf(h):
    # Exact (erf-based) GELU in f32 — matches PyTorch nn.GELU default.
    return 0.5 * h * (1.0 + jax.lax.erf(h * (1.0 / math.sqrt(2.0))))


# ----------------------------------------------------------------------------
# Kernels
# ----------------------------------------------------------------------------
def _mlp_kernel_resident(x_ref, w1_ref, b1_ref, w2_ref, b2_ref, o_ref):
    """Grid = (M tiles,).  Weights are grid-resident (constant index_map)."""
    h = jnp.dot(x_ref[...], w1_ref[...], preferred_element_type=jnp.float32)
    h = _gelu_erf(h + b1_ref[...].astype(jnp.float32))
    out = jnp.dot(h.astype(w2_ref.dtype), w2_ref[...],
                  preferred_element_type=jnp.float32)
    o_ref[...] = (out + b2_ref[...].astype(jnp.float32)).astype(o_ref.dtype)


def _mlp_kernel_htiled(x_ref, w1_ref, b1_ref, w2_ref, b2_ref, o_ref, acc_ref):
    """Grid = (M tiles, H tiles).  H is the fc2 contraction; acc_ref is f32."""
    h_idx = pl.program_id(1)

    h = jnp.dot(x_ref[...], w1_ref[...], preferred_element_type=jnp.float32)
    h = _gelu_erf(h + b1_ref[...].astype(jnp.float32))
    partial = jnp.dot(h.astype(w2_ref.dtype), w2_ref[...],
                      preferred_element_type=jnp.float32)

    # First H step writes directly — saves a full (tm, d_out) zero-fill + add.
    @pl.when(h_idx == 0)
    def _():
        acc_ref[...] = partial

    @pl.when(h_idx != 0)
    def _():
        acc_ref[...] += partial

    @pl.when(h_idx == pl.num_programs(1) - 1)
    def _():
        o_ref[...] = (acc_ref[...] + b2_ref[...].astype(jnp.float32)
                      ).astype(o_ref.dtype)


# ----------------------------------------------------------------------------
# VMEM sizing (double-buffered pipeline blocks + intermediates)
# ----------------------------------------------------------------------------
def _needed_resident(tm, d_in, h_dim, d_out, x_isz, w_isz, out_isz):
    return (2 * tm * d_in * x_isz            # x tile
            + 2 * d_in * h_dim * w_isz       # w1 (resident)
            + 2 * h_dim * w_isz              # b1
            + 2 * h_dim * d_out * w_isz      # w2 (resident)
            + 2 * d_out * w_isz              # b2
            + 2 * tm * d_out * out_isz       # output tile
            + 2 * tm * h_dim * 4)            # f32 hidden intermediate (+ cast)


def _needed_htiled(tm, th, d_in, d_out, x_isz, w_isz, out_isz):
    return (2 * tm * d_in * x_isz
            + 2 * d_in * th * w_isz
            + 2 * th * w_isz
            + 2 * th * d_out * w_isz
            + 2 * d_out * w_isz
            + 2 * tm * d_out * out_isz
            + tm * d_out * 4                 # f32 accumulator scratch
            + 2 * tm * th * 4)               # f32 hidden intermediate (+ cast)


# ----------------------------------------------------------------------------
# Wrapper
# ----------------------------------------------------------------------------
def mlp_pallas(x, w1, b1, w2, b2, *, cast_to_bf16=False, force_h_tiling=False):
    """Fused fc1 -> GELU(erf) -> fc2.  Dropout with p=0.0 is the identity.

    x: (..., D_in); w1: (D_in, H); b1: (H,); w2: (H, D_out); b2: (D_out,).
    Weights are stored transposed vs. PyTorch nn.Linear ((in, out) layout).
    cast_to_bf16: optional precision change (bf16 MXU operands, f32 accumulate).
    """
    orig_shape = x.shape
    d_in = orig_shape[-1]
    h_dim = w1.shape[1]
    d_out = w2.shape[1]
    out_dtype = x.dtype

    if cast_to_bf16 and x.dtype == jnp.float32:
        x = x.astype(jnp.bfloat16)
        w1 = w1.astype(jnp.bfloat16)
        w2 = w2.astype(jnp.bfloat16)

    x2 = x.reshape(-1, d_in)
    m = x2.shape[0]

    # Lane-dense output: pad D_out to a multiple of 128 (zero w2 cols / b2
    # entries -> zero output cols, sliced off at the end).
    d_out_pad = _round_up(max(d_out, 1), 128)
    if d_out_pad != d_out:
        w2p = jnp.pad(w2, ((0, 0), (0, d_out_pad - d_out)))
        b2p = jnp.pad(b2, (0, d_out_pad - d_out))
    else:
        w2p, b2p = w2, b2

    x_isz = x2.dtype.itemsize
    w_isz = w1.dtype.itemsize
    out_isz = jnp.dtype(out_dtype).itemsize

    # Sublane packing for the row tile: 8 rows/vreg at 32-bit, 16 bf16, 32 int8.
    packing = 8 * max(1, 4 // x_isz)

    vmem_cap = _vmem_capacity_bytes()
    budget = int(vmem_cap * 0.75)          # headroom for Mosaic internal scratch

    tm_cap = _round_up(m, packing)
    base = [c for c in (1024, 512, 256, 128, 64, 32, 16, 8) if c % packing == 0]
    if not base:
        base = [packing]
    tm_candidates = sorted({min(c, tm_cap) for c in base}, reverse=True)

    th_cap = _round_up(h_dim, 128)
    th_candidates = sorted({min(c, th_cap) for c in (2048, 1024, 512, 256, 128)},
                           reverse=True)

    mode, tm, th = None, None, None
    if not force_h_tiling:
        for cand in tm_candidates:
            if _needed_resident(cand, d_in, h_dim, d_out_pad,
                                x_isz, w_isz, out_isz) <= budget:
                mode, tm = "resident", cand
                break
    if mode is None:
        for tmc in tm_candidates:
            for thc in th_candidates:
                if _needed_htiled(tmc, thc, d_in, d_out_pad,
                                  x_isz, w_isz, out_isz) <= budget:
                    mode, tm, th = "htiled", tmc, thc
                    break
            if mode is not None:
                break
    if mode is None:
        # Last resort: smallest tiling (may exceed the soft budget, but gives
        # Mosaic the best chance to compile instead of failing outright).
        mode, tm, th = "htiled", tm_candidates[-1], th_candidates[-1]

    m_pad = _round_up(m, tm)
    if m_pad != m:
        x2 = jnp.pad(x2, ((0, m_pad - m), (0, 0)))

    if mode == "resident":
        b1_2d = b1.reshape(1, h_dim)
        b2_2d = b2p.reshape(1, d_out_pad)
        grid = (m_pad // tm,)
        in_specs = [
            pl.BlockSpec((tm, d_in), lambda i: (i, 0)),          # x rows
            pl.BlockSpec((d_in, h_dim), lambda i: (0, 0)),       # w1 (resident)
            pl.BlockSpec((1, h_dim), lambda i: (0, 0)),          # b1 (resident)
            pl.BlockSpec((h_dim, d_out_pad), lambda i: (0, 0)),  # w2 (resident)
            pl.BlockSpec((1, d_out_pad), lambda i: (0, 0)),      # b2 (resident)
        ]
        out_specs = pl.BlockSpec((tm, d_out_pad), lambda i: (i, 0))
        scratch_shapes = []
        kernel = _mlp_kernel_resident
        dim_sem = ("parallel",)
        needed = _needed_resident(tm, d_in, h_dim, d_out_pad,
                                  x_isz, w_isz, out_isz)
        bytes_accessed = (m_pad * d_in * x_isz
                          + d_in * h_dim * w_isz + h_dim * w_isz
                          + h_dim * d_out_pad * w_isz + d_out_pad * w_isz
                          + m_pad * d_out_pad * out_isz)
        args = (x2, w1, b1_2d, w2p, b2_2d)
    else:
        h_pad = _round_up(h_dim, th)
        # Padded hidden columns: zero w1 cols + zero b1 -> GELU(0)=0 -> zero
        # contribution through the zero-padded w2 rows.
        if h_pad != h_dim:
            w1h = jnp.pad(w1, ((0, 0), (0, h_pad - h_dim)))
            b1h = jnp.pad(b1, (0, h_pad - h_dim))
            w2h = jnp.pad(w2p, ((0, h_pad - h_dim), (0, 0)))
        else:
            w1h, b1h, w2h = w1, b1, w2p
        b1_2d = b1h.reshape(1, h_pad)
        b2_2d = b2p.reshape(1, d_out_pad)
        grid = (m_pad // tm, h_pad // th)
        in_specs = [
            pl.BlockSpec((tm, d_in), lambda i, h: (i, 0)),        # x rows
            pl.BlockSpec((d_in, th), lambda i, h: (0, h)),        # w1 H-chunk
            pl.BlockSpec((1, th), lambda i, h: (0, h)),           # b1 H-chunk
            pl.BlockSpec((th, d_out_pad), lambda i, h: (h, 0)),   # w2 H-chunk
            pl.BlockSpec((1, d_out_pad), lambda i, h: (0, 0)),    # b2
        ]
        out_specs = pl.BlockSpec((tm, d_out_pad), lambda i, h: (i, 0))
        scratch_shapes = [pltpu.VMEM((tm, d_out_pad), jnp.float32)]
        kernel = _mlp_kernel_htiled
        dim_sem = ("parallel", "arbitrary")
        needed = _needed_htiled(tm, th, d_in, d_out_pad, x_isz, w_isz, out_isz)
        # Under H tiling, weights are re-streamed once per M tile.
        bytes_accessed = (m_pad * d_in * x_isz
                          + (m_pad // tm) * (d_in * h_pad * w_isz
                                             + h_pad * w_isz
                                             + h_pad * d_out_pad * w_isz)
                          + d_out_pad * w_isz
                          + m_pad * d_out_pad * out_isz)
        args = (x2, w1h, b1_2d, w2h, b2_2d)

    vmem_limit = int(min(max(int(needed * 1.3) + (2 << 20), 32 << 20), vmem_cap))

    cost = pl.CostEstimate(
        flops=2 * m * h_dim * (d_in + d_out),
        transcendentals=m * h_dim,
        bytes_accessed=int(bytes_accessed),
    )

    out = pl.pallas_call(
        kernel,
        out_shape=jax.ShapeDtypeStruct((m_pad, d_out_pad), out_dtype),
        grid_spec=pltpu.PrefetchScalarGridSpec(
            num_scalar_prefetch=0,
            grid=grid,
            in_specs=in_specs,
            out_specs=out_specs,
            scratch_shapes=scratch_shapes),
        compiler_params=pltpu.CompilerParams(
            dimension_semantics=dim_sem,
            vmem_limit_bytes=vmem_limit),
        cost_estimate=cost,
    )(*args)

    out = out[:m, :d_out]
    return out.reshape(*orig_shape[:-1], d_out)


def mlp_reference(x, w1, b1, w2, b2):
    h = jnp.dot(x, w1) + b1
    h = 0.5 * h * (1.0 + jax.lax.erf(h / jnp.sqrt(2.0)))
    return jnp.dot(h, w2) + b2


if __name__ == "__main__":
    # Small shapes consistent with the module: (B, N, in_features) tokens.
    B, N = 2, 8
    in_features, hidden_features, out_features = 32, 64, 32

    key = jax.random.PRNGKey(0)
    kx, kw1, kb1, kw2, kb2 = jax.random.split(key, 5)

    x = jax.random.normal(kx, (B, N, in_features), dtype=jnp.float32)

    # PyTorch nn.Linear-style uniform init, stored transposed: (in, out).
    lim1 = 1.0 / math.sqrt(in_features)
    w1 = jax.random.uniform(kw1, (in_features, hidden_features),
                            minval=-lim1, maxval=lim1, dtype=jnp.float32)
    b1 = jax.random.uniform(kb1, (hidden_features,),
                            minval=-lim1, maxval=lim1, dtype=jnp.float32)
    lim2 = 1.0 / math.sqrt(hidden_features)
    w2 = jax.random.uniform(kw2, (hidden_features, out_features),
                            minval=-lim2, maxval=lim2, dtype=jnp.float32)
    b2 = jax.random.uniform(kb2, (out_features,),
                            minval=-lim2, maxval=lim2, dtype=jnp.float32)

    ref = mlp_reference(x, w1, b1, w2, b2)

    # Weight-resident path (default for these sizes).
    out = jax.block_until_ready(mlp_pallas(x, w1, b1, w2, b2))
    assert out.shape == (B, N, out_features)
    assert jnp.allclose(out, ref, atol=1e-5, rtol=1e-5), "resident path mismatch"

    # Exercise the H-tiled fallback path as well for correctness coverage.
    out_ht = jax.block_until_ready(
        mlp_pallas(x, w1, b1, w2, b2, force_h_tiling=True))
    assert jnp.allclose(out_ht, ref, atol=1e-5, rtol=1e-5), "H-tiled path mismatch"

    print("KERNEL_OK")
</pallas_src>

<mosaic_0001>
module attributes {stable_mosaic.version = 11 : i64} {
  func.func @_mlp_kernel_resident(%arg0: i32, %arg1: memref<16x32xf32, #tpu.memory_space<vmem>>, %arg2: memref<32x64xf32, #tpu.memory_space<vmem>>, %arg3: memref<1x64xf32, #tpu.memory_space<vmem>>, %arg4: memref<64x128xf32, #tpu.memory_space<vmem>>, %arg5: memref<1x128xf32, #tpu.memory_space<vmem>>, %arg6: memref<16x128xf32, #tpu.memory_space<vmem>>) attributes {dimension_semantics = [#tpu.dimension_semantics<parallel>], iteration_bounds = array<i64: 1>, scalar_prefetch = 0 : i64, scratch_operands = 0 : i64, tpu.core_type = #tpu.core_type<tc>, window_params = [{transform_indices = @transform_0, window_bounds = array<i64: 16, 32>}, {pipeline_mode = #tpu.pipeline_mode<synchronous>, transform_indices = @transform_1, window_bounds = array<i64: 32, 64>}, {pipeline_mode = #tpu.pipeline_mode<synchronous>, transform_indices = @transform_2, window_bounds = array<i64: 1, 64>}, {pipeline_mode = #tpu.pipeline_mode<synchronous>, transform_indices = @transform_3, window_bounds = array<i64: 64, 128>}, {pipeline_mode = #tpu.pipeline_mode<synchronous>, transform_indices = @transform_4, window_bounds = array<i64: 1, 128>}, {transform_indices = @transform_5, window_bounds = array<i64: 16, 128>}]} {
    %c0 = arith.constant 0 : index
    %c0_0 = arith.constant 0 : index
    %0 = vector.load %arg1[%c0, %c0_0] : memref<16x32xf32, #tpu.memory_space<vmem>>, vector<16x32xf32>
    %c0_1 = arith.constant 0 : index
    %c0_2 = arith.constant 0 : index
    %1 = vector.load %arg2[%c0_1, %c0_2] : memref<32x64xf32, #tpu.memory_space<vmem>>, vector<32x64xf32>
    %cst = arith.constant dense<0.000000e+00> : vector<16x64xf32>
    %2 = tpu.matmul %0, %1, %cst {dimension_numbers = #tpu.dot_dimension_numbers<[1], [0], [0], [1], [0, 0, 1, 1], [], []>} : vector<16x32xf32>, vector<32x64xf32>, vector<16x64xf32> -> vector<16x64xf32>
    %c0_3 = arith.constant 0 : index
    %c0_4 = arith.constant 0 : index
    %3 = vector.load %arg3[%c0_3, %c0_4] : memref<1x64xf32, #tpu.memory_space<vmem>>, vector<1x64xf32>
    %4 = vector.broadcast %3 : vector<1x64xf32> to vector<16x64xf32>
    %5 = arith.addf %2, %4 : vector<16x64xf32>
    %cst_5 = arith.constant 5.000000e-01 : f32
    %6 = vector.broadcast %cst_5 : f32 to vector<16x64xf32>
    %7 = arith.mulf %6, %5 : vector<16x64xf32>
    %cst_6 = arith.constant 0.707106769 : f32
    %8 = vector.broadcast %cst_6 : f32 to vector<16x64xf32>
    %9 = arith.mulf %5, %8 : vector<16x64xf32>
    %10 = math.erf %9 : vector<16x64xf32>
    %cst_7 = arith.constant 1.000000e+00 : f32
    %11 = vector.broadcast %cst_7 : f32 to vector<16x64xf32>
    %12 = arith.addf %11, %10 : vector<16x64xf32>
    %13 = arith.mulf %7, %12 : vector<16x64xf32>
    %c0_8 = arith.constant 0 : index
    %c0_9 = arith.constant 0 : index
    %14 = vector.load %arg4[%c0_8, %c0_9] : memref<64x128xf32, #tpu.memory_space<vmem>>, vector<64x128xf32>
    %cst_10 = arith.constant dense<0.000000e+00> : vector<16x128xf32>
    %15 = tpu.matmul %13, %14, %cst_10 {dimension_numbers = #tpu.dot_dimension_numbers<[1], [0], [0], [1], [0, 0, 1, 1], [], []>} : vector<16x64xf32>, vector<64x128xf32>, vector<16x128xf32> -> vector<16x128xf32>
    %c0_11 = arith.constant 0 : index
    %c0_12 = arith.constant 0 : index
    %16 = vector.load %arg5[%c0_11, %c0_12] : memref<1x128xf32, #tpu.memory_space<vmem>>, vector<1x128xf32>
    %17 = vector.broadcast %16 : vector<1x128xf32> to vector<16x128xf32>
    %18 = arith.addf %15, %17 : vector<16x128xf32>
    %c0_13 = arith.constant 0 : index
    %c0_14 = arith.constant 0 : index
    %19 = vector.load %arg6[%c0_13, %c0_14] : memref<16x128xf32, #tpu.memory_space<vmem>>, vector<16x128xf32>
    tpu.vector_store %arg6[%c0_13, %c0_14], %18 {strides = array<i32>} : memref<16x128xf32, #tpu.memory_space<vmem>>, vector<16x128xf32>,
    return
  }
  func.func @transform_0(%arg0: i32) -> (i32, i32) {
    %c0_i32 = arith.constant 0 : i32
    %c0_i32_0 = arith.constant 0 : i32
    return %arg0, %c0_i32 : i32, i32
  }
  func.func @transform_1(%arg0: i32) -> (i32, i32) {
    %c0_i32 = arith.constant 0 : i32
    %c0_i32_0 = arith.constant 0 : i32
    %c0_i32_1 = arith.constant 0 : i32
    return %c0_i32, %c0_i32_0 : i32, i32
  }
  func.func @transform_2(%arg0: i32) -> (i32, i32) {
    %c0_i32 = arith.constant 0 : i32
    %c0_i32_0 = arith.constant 0 : i32
    %c0_i32_1 = arith.constant 0 : i32
    return %c0_i32, %c0_i32_0 : i32, i32
  }
  func.func @transform_3(%arg0: i32) -> (i32, i32) {
    %c0_i32 = arith.constant 0 : i32
    %c0_i32_0 = arith.constant 0 : i32
    %c0_i32_1 = arith.constant 0 : i32
    return %c0_i32, %c0_i32_0 : i32, i32
  }
  func.func @transform_4(%arg0: i32) -> (i32, i32) {
    %c0_i32 = arith.constant 0 : i32
    %c0_i32_0 = arith.constant 0 : i32
    %c0_i32_1 = arith.constant 0 : i32
    return %c0_i32, %c0_i32_0 : i32, i32
  }
  func.func @transform_5(%arg0: i32) -> (i32, i32) {
    %c0_i32 = arith.constant 0 : i32
    %c0_i32_0 = arith.constant 0 : i32
    return %arg0, %c0_i32 : i32, i32
  }
}

</mosaic_0001>

<llo_original>
// kernel: tpu_custom_call.1
$region0: #{tpu_custom_call.1}
  #allocation0 [shape = 'u32[]', space=smem, size = 0x4, offset = 0x4, fixed_abs, tag = 'smem constant byte address 0x4 - core index']
  #allocation1 [shape = 'u32[72,128]{1,0:T(1,128)}', space=vmem, size = 0x9000, scoped, tag = 'internal scratch']
  %s0 = inlined_call_operand.hbm [shape: f32[16,32], index: 0, kind: input, shape index: {}]
  %s1 = inlined_call_operand.hbm [shape: f32[32,64], index: 1, kind: input, shape index: {}]
  %s2 = inlined_call_operand.vmem [shape: f32[1,64], index: 2, kind: input, shape index: {}]
  %s3 = inlined_call_operand.hbm [shape: f32[64,128], index: 3, kind: input, shape index: {}]
  %s4 = inlined_call_operand.vmem [shape: f32[1,128], index: 4, kind: input, shape index: {}]
  %s5 = inlined_call_operand.hbm [shape: f32[16,128], index: 5, kind: output, shape index: {}]
  %s6 = sld [smem:[#allocation0]]
  $region42: #{tpu_custom_call.1} parent=0
    _
  %s8 = ssub.s32 1, %s6
  %s9 = scalar_select 0, %s8, %s6
  $region1: #{tpu_custom_call.1} parent=0
    #allocation2 [shape = 'u8[8192]{0}', space=vmem, size = 0x2000, scoped, tag = 'input window, operand 0, single buffered']
    #allocation3 [shape = 's32[1]{0}', space=sflag, size = 0x4, scoped, tag = 'scoped memory for tpu_custom_call.1']
    #allocation4 [shape = 's32[1]{0}', space=sflag, size = 0x4, scoped, tag = 'scoped memory for tpu_custom_call.1']
    #allocation5 [shape = 'u8[16384]{0}', space=vmem, size = 0x4000, scoped, tag = 'input window, operand 1, single buffered']
    #allocation6 [shape = 's32[1]{0}', space=sflag, size = 0x4, scoped, tag = 'scoped memory for tpu_custom_call.1']
    #allocation7 [shape = 'u8[32768]{0}', space=vmem, size = 0x8000, scoped, tag = 'input window, operand 3, single buffered']
    #allocation8 [shape = 'u8[8192]{0}', space=vmem, size = 0x2000, scoped, tag = 'output window, operand 0, single buffered']
    %10 = vsyncpa [#allocation3], 0
    %11 = vsyncpa [#allocation6], 0
    %12 = vsyncpa [#allocation4], 0
    // Predicated region
    $region2: #{tpu_custom_call.1} parent=1 // pred_check
      _
    $region3: #{tpu_custom_call.1} parent=1 // pred_check_branch
      %14 = sbr.rel (0) target = $region5
    $region4: #{tpu_custom_call.1} parent=1 // pred_region
      %16 = vsyncadd [#allocation3], 0
      %s17 = sshll.u32 %s0, 4
      %s18 = int_to_ptr.hbm [resolvable:$true] %s17
      %s19 = sshll.u32 [#allocation2], 4
      %s20 = int_to_ptr.vmem [resolvable:$true] %s19
      %25 = dma.hbm_to_vmem [thread:$0]  %s18, 256, %s20, [#allocation3], 128, 128, 8
    $region5: #{tpu_custom_call.1} parent=1 // pred_fallthru
      _
    // Predicated region
    $region6: #{tpu_custom_call.1} parent=1 // pred_check
      _
    $region7: #{tpu_custom_call.1} parent=1 // pred_check_branch
      %27 = sbr.rel (0) target = $region9
    $region8: #{tpu_custom_call.1} parent=1 // pred_region
      %29 = vsyncadd [#allocation6], 0
      %s30 = sshll.u32 %s1, 4
      %s31 = int_to_ptr.hbm [resolvable:$true] %s30
      %s32 = sshll.u32 [#allocation5], 4
      %s33 = int_to_ptr.vmem [resolvable:$true] %s32
      %38 = dma.hbm_to_vmem [thread:$0]  %s31, 512, %s33, [#allocation6], 128, 128, 8
    $region9: #{tpu_custom_call.1} parent=1 // pred_fallthru
      _
    // Predicated region
    $region10: #{tpu_custom_call.1} parent=1 // pred_check
      _
    $region11: #{tpu_custom_call.1} parent=1 // pred_check_branch
      %40 = sbr.rel (0) target = $region13
    $region12: #{tpu_custom_call.1} parent=1 // pred_region
      _
    $region13: #{tpu_custom_call.1} parent=1 // pred_fallthru
      _
    // Predicated region
    $region14: #{tpu_custom_call.1} parent=1 // pred_check
      _
    $region15: #{tpu_custom_call.1} parent=1 // pred_check_branch
      %42 = sbr.rel (0) target = $region17
    $region16: #{tpu_custom_call.1} parent=1 // pred_region
      %44 = vsyncadd [#allocation6], 0
      %s45 = sshll.u32 %s3, 4
      %s46 = int_to_ptr.hbm [resolvable:$true] %s45
      %s47 = sshll.u32 [#allocation7], 4
      %s48 = int_to_ptr.vmem [resolvable:$true] %s47
      %53 = dma.hbm_to_vmem [thread:$0]  %s46, 1024, %s48, [#allocation6], 128, 128, 8
    $region17: #{tpu_custom_call.1} parent=1 // pred_fallthru
      _
    // Predicated region
    $region18: #{tpu_custom_call.1} parent=1 // pred_check
      _
    $region19: #{tpu_custom_call.1} parent=1 // pred_check_branch
      %55 = sbr.rel (0) target = $region21
    $region20: #{tpu_custom_call.1} parent=1 // pred_region
      _
    $region21: #{tpu_custom_call.1} parent=1 // pred_fallthru
      _
    // Predicated region
    $region22: #{tpu_custom_call.1} parent=1 // pred_check
      _
    $region23: #{tpu_custom_call.1} parent=1 // pred_check_branch
      %57 = sbr.rel (0) target = $region25
    $region24: #{tpu_custom_call.1} parent=1 // pred_region
      %59 = dma.done [#allocation3], 256
    $region25: #{tpu_custom_call.1} parent=1 // pred_fallthru
      _
    // Predicated region
    $region26: #{tpu_custom_call.1} parent=1 // pred_check
      _
    $region27: #{tpu_custom_call.1} parent=1 // pred_check_branch
      %61 = sbr.rel (0) target = $region29
    $region28: #{tpu_custom_call.1} parent=1 // pred_region
      %63 = dma.done [#allocation6], 512
    $region29: #{tpu_custom_call.1} parent=1 // pred_fallthru
      _
    // Predicated region
    $region30: #{tpu_custom_call.1} parent=1 // pred_check
      _
    $region31: #{tpu_custom_call.1} parent=1 // pred_check_branch
      %65 = sbr.rel (0) target = $region33
    $region32: #{tpu_custom_call.1} parent=1 // pred_region
      %67 = dma.done [#allocation6], 1024
    $region33: #{tpu_custom_call.1} parent=1 // pred_fallthru
      _
    %v68 = vld [vmem:[#allocation2] sm:$0xff]
    %v69 = vld [vmem:[#allocation2 + $0x8] sm:$0xff]
    %v70 = vld [vmem:[#allocation5] sm:$0xff]
    %v71 = vld [vmem:[#allocation5 + $0x8] sm:$0xff]
    %v72 = vld [vmem:[#allocation5 + $0x10] sm:$0xff]
    %v73 = vld [vmem:[#allocation5 + $0x18] sm:$0xff]
    %v74 = vld [vmem:[%s2] sm:$0x1]
    %v76 = vperm.slane %v74, 0
    %vm78 = vcmask 261120
    %v80 = vsel %vm78, %v68, 0
    %v83 = vsel %vm78, %v69, 0
    %85 = vmatpush.msra.mxu0 0.0
    %86 = vmatpush.msra.mxu0 0.0
    %87 = vmatpush.msra.mxu0 0.0
    %88 = vmatpush.msra.mxu0 0.0
    %89 = vmatpush.msra.mxu0 0.0
    %90 = vmatpush.msra.mxu0 0.0
    %91 = vmatpush.msra.mxu0 0.0
    %92 = vmatpush.msra.mxu0 0.0
    %93 = vmatpush.msra.mxu0 0.0
    %94 = vmatpush.msra.mxu0 0.0
    %95 = vmatpush.msra.mxu0 0.0
    %96 = vmatpush.msra.mxu0 0.0
    %97 = vmatpush.msra.mxu0 %v73
    %98 = vmatpush.msra.mxu0 %v72
    %99 = vmatpush.msra.mxu0 %v71
    %100 = vmatpush.msra.mxu0 %v70
    %101 = vmatmul.f32.gmra.mxu0 %v80
    %v102 = vpop.f32.mrf.mxu0
    %v103 = vadd.f32 %v76, %v102
    %104 = vmatmul.f32.gmra.mxu0 %v83
    %v105 = vpop.f32.mrf.mxu0
    %v106 = vadd.f32 %v76, %v105
    %107 = vdwg.mxu0
    %v108 = vmul.f32 %v103, 0.5
    %v109 = vmul.f32 %v106, 0.5
    %v110 = vmul.f32 %v103, 0.70710677
    %v111 = vmul.f32 %v106, 0.70710677
    %v112 = vmul.f32 %v110, %v110
    %v113 = vmin.f32 16.0, %v112
    %v114 = vmul.f32 %v113, 2.1237322e-06
    %v115 = vadd.f32 %v114, 0.00028619796
    %v116 = vmul.f32 %v113, %v115
    %v117 = vadd.f32 %v116, 0.0036580483
    %v118 = vmul.f32 %v113, %v117
    %v119 = vadd.f32 %v118, 0.05243302
    %v120 = vmul.f32 %v113, %v119
    %v121 = vadd.f32 %v120, 0.18741608
    %v122 = vmul.f32 %v113, %v121
    %v123 = vadd.f32 %v122, 1.1283791
    %v124 = vmul.f32 %v110, %v123
    %v125 = vmul.f32 %v113, 3.8918573e-05
    %v126 = vadd.f32 %v125, 0.001143296
    %v127 = vmul.f32 %v113, %v126
    %v128 = vadd.f32 %v127, 0.014752088
    %v129 = vmul.f32 %v113, %v128
    %v130 = vadd.f32 %v129, 0.112945676
    %v131 = vmul.f32 %v113, %v130
    %v132 = vadd.f32 %v131, 0.4994258
    %v133 = vmul.f32 %v113, %v132
    %v134 = vadd.f32 %v133, 1.0
    %v135 = vrcp.pop %v134
    %v136 = vmul.f32 %v134, %v135
    %v137 = vsub.f32 1.0, %v136
    %v138 = vmul.f32 %v135, %v137
    %v139 = vadd.f32 %v135, %v138
    %vm140 = vweird.f32 %v134
    %vm141 = vweird.f32 %v135
    %vm142 = vmor %vm140, %vm141
    %v143 = vsel %vm142, %v135, %v139
    %v144 = vand.u32 2147483647, %v134
    %vm145 = vcmp.eq.f32.partialorder %v144, 8.507059e+37
    %v146 = vand.u32 %v134, 2147483648
    %v147 = vor.u32 1.1754944e-38, %v146
    %v148 = vsel %vm145, %v147, %v143
    %v149 = vmul.f32 %v124, %v148
    %v150 = vmin.f32 %v149, 1.0
    %v151 = vmax.f32 %v150, -1.0
    %v152 = vmul.f32 %v111, %v111
    %v153 = vmin.f32 16.0, %v152
    %v154 = vmul.f32 %v153, 2.1237322e-06
    %v155 = vadd.f32 %v154, 0.00028619796
    %v156 = vmul.f32 %v153, %v155
    %v157 = vadd.f32 %v156, 0.0036580483
    %v158 = vmul.f32 %v153, %v157
    %v159 = vadd.f32 %v158, 0.05243302
    %v160 = vmul.f32 %v153, %v159
    %v161 = vadd.f32 %v160, 0.18741608
    %v162 = vmul.f32 %v153, %v161
    %v163 = vadd.f32 %v162, 1.1283791
    %v164 = vmul.f32 %v111, %v163
    %v165 = vmul.f32 %v153, 3.8918573e-05
    %v166 = vadd.f32 %v165, 0.001143296
    %v167 = vmul.f32 %v153, %v166
    %v168 = vadd.f32 %v167, 0.014752088
    %v169 = vmul.f32 %v153, %v168
    %v170 = vadd.f32 %v169, 0.112945676
    %v171 = vmul.f32 %v153, %v170
    %v172 = vadd.f32 %v171, 0.4994258
    %v173 = vmul.f32 %v153, %v172
    %v174 = vadd.f32 %v173, 1.0
    %v175 = vrcp.pop %v174
    %v176 = vmul.f32 %v174, %v175
    %v177 = vsub.f32 1.0, %v176
    %v178 = vmul.f32 %v175, %v177
    %v179 = vadd.f32 %v175, %v178
    %vm180 = vweird.f32 %v174
    %vm181 = vweird.f32 %v175
    %vm182 = vmor %vm180, %vm181
    %v183 = vsel %vm182, %v175, %v179
    %v184 = vand.u32 2147483647, %v174
    %vm185 = vcmp.eq.f32.partialorder %v184, 8.507059e+37
    %v186 = vand.u32 %v174, 2147483648
    %v187 = vor.u32 1.1754944e-38, %v186
    %v188 = vsel %vm185, %v187, %v183
    %v189 = vmul.f32 %v164, %v188
    %v190 = vmin.f32 %v189, 1.0
    %v191 = vmax.f32 %v190, -1.0
    %v192 = vadd.f32 %v151, 1.0
    %v193 = vadd.f32 %v191, 1.0
    %v194 = vmul.f32 %v108, %v192
    %v195 = vmul.f32 %v109, %v193
    %v196 = vld [vmem:[#allocation7] sm:$0xff]
    %v197 = vld [vmem:[#allocation7 + $0x8] sm:$0xff]
    %v198 = vld [vmem:[#allocation7 + $0x10] sm:$0xff]
    %v199 = vld [vmem:[#allocation7 + $0x18] sm:$0xff]
    %v200 = vld [vmem:[#allocation7 + $0x20] sm:$0xff]
    %v201 = vld [vmem:[#allocation7 + $0x28] sm:$0xff]
    %v202 = vld [vmem:[#allocation7 + $0x30] sm:$0xff]
    %v203 = vld [vmem:[#allocation7 + $0x38] sm:$0xff]
    %v204 = vld [vmem:[%s4] sm:$0x1]
    %v206 = vperm.slane %v204, 0
    %vm208 = vcmask 523264
    %v210 = vsel %vm208, %v194, 0
    %v213 = vsel %vm208, %v195, 0
    %215 = vmatpush.msra.mxu0 0.0
    %216 = vmatpush.msra.mxu0 0.0
    %217 = vmatpush.msra.mxu0 0.0
    %218 = vmatpush.msra.mxu0 0.0
    %219 = vmatpush.msra.mxu0 0.0
    %220 = vmatpush.msra.mxu0 0.0
    %221 = vmatpush.msra.mxu0 0.0
    %222 = vmatpush.msra.mxu0 0.0
    %223 = vmatpush.msra.mxu0 %v203
    %224 = vmatpush.msra.mxu0 %v202
    %225 = vmatpush.msra.mxu0 %v201
    %226 = vmatpush.msra.mxu0 %v200
    %227 = vmatpush.msra.mxu0 %v199
    %228 = vmatpush.msra.mxu0 %v198
    %229 = vmatpush.msra.mxu0 %v197
    %230 = vmatpush.msra.mxu0 %v196
    %231 = vmatmul.f32.gmra.mxu0 %v210
    %v232 = vpop.f32.mrf.mxu0
    %v233 = vadd.f32 %v206, %v232
    %234 = vmatmul.f32.gmra.mxu0 %v213
    %v235 = vpop.f32.mrf.mxu0
    %v236 = vadd.f32 %v206, %v235
    %237 = vdwg.mxu0
    %238 = vst [vmem:[#allocation8] sm:$0xff] %v233
    %239 = vst [vmem:[#allocation8 + $0x8] sm:$0xff] %v236
    // Predicated region
    $region34: #{tpu_custom_call.1} parent=1 // pred_check
      _
    $region35: #{tpu_custom_call.1} parent=1 // pred_check_branch
      %241 = sbr.rel (0) target = $region37
    $region36: #{tpu_custom_call.1} parent=1 // pred_region
      %243 = vsyncadd [#allocation4], 0
      %s244 = sshll.u32 [#allocation8], 4
      %s245 = int_to_ptr.vmem [resolvable:$true] %s244
      %s246 = sshll.u32 %s5, 4
      %s247 = int_to_ptr.hbm [resolvable:$true] %s246
      %252 = dma.vmem_to_hbm [thread:$0]  %s245, 256, %s247, [#allocation4], 128, 128, 8
    $region37: #{tpu_custom_call.1} parent=1 // pred_fallthru
      _
    // Predicated region
    $region38: #{tpu_custom_call.1} parent=1 // pred_check
      _
    $region39: #{tpu_custom_call.1} parent=1 // pred_check_branch
      %254 = sbr.rel (0) target = $region41
    $region40: #{tpu_custom_call.1} parent=1 // pred_region
      %256 = dma.done [#allocation4], 256
    $region41: #{tpu_custom_call.1} parent=1 // pred_fallthru
      _
    %257 = vsyncpa [#allocation3], 1
    %258 = vsyncpa [#allocation6], 1
    %259 = vsyncpa [#allocation4], 1

</llo_original>
